<compile_context>
chip_gen: v5e
topology: v5e:2x2
jax: 0.10.0
libtpu: 0.0.40
codegen_flags: <defaults>
</compile_context>

<pallas_src>
import functools

import jax
import jax.numpy as jnp
from jax.experimental import pallas as pl
from jax.experimental.pallas import tpu as pltpu


def _focal_loss_kernel(logits_ref, targets_ref, out_ref, *,
                       gamma, alpha, batch, block_b):
    """Per-batch-tile focal loss; writes one lane-dense partial-sum block."""
    logits = logits_ref[...].astype(jnp.float32)              # (TB, C), f32 math
    tb, c = logits.shape

    # Numerically-stable log-sum-exp; after this only `shifted` stays live as a
    # (TB, C) f32 temporary (raw f32 logits and the max are dead).
    m = jnp.max(logits, axis=-1, keepdims=True)                # (TB, 1)
    shifted = logits - m                                       # (TB, C)
    sum_exp = jnp.sum(jnp.exp(shifted), axis=-1, keepdims=True)

    # Target-logit gather on `shifted` (the max cancels in ce below). A (1, C)
    # iota lets the == do the broadcast instead of materializing a (TB, C) iota.
    tgt = targets_ref[...]                                     # (TB, 1) int32
    cls_iota = jax.lax.broadcasted_iota(jnp.int32, (1, c), 1)  # (1, C)
    tgt_shifted = jnp.sum(jnp.where(cls_iota == tgt, shifted, 0.0),
                          axis=-1, keepdims=True)              # (TB, 1)

    ce = jnp.log(sum_exp) - tgt_shifted                        # per-sample CE
    pt = jnp.exp(-ce)
    one_minus_pt = jnp.maximum(1.0 - pt, 0.0)                  # pt can round >1

    # Integer gamma -> plain VPU multiplies; float gamma -> pow (EUP) fallback.
    if float(gamma).is_integer():
        w = jax.lax.integer_pow(one_minus_pt, int(gamma))
    else:
        w = one_minus_pt ** jnp.float32(gamma)

    focal = jnp.float32(alpha) * w * ce                        # (TB, 1)

    # Mask padded rows of the last partial tile, reduce to a per-tile sum and
    # write it broadcast over the (1, 8, 128) lane-dense output block.
    row = jax.lax.broadcasted_iota(jnp.int32, (tb, 1), 0)
    valid = (pl.program_id(0) * block_b + row) < batch
    tile_sum = jnp.sum(jnp.where(valid, focal, 0.0), keepdims=True)   # (1, 1)
    out_ref[...] = jnp.broadcast_to(tile_sum.reshape(1, 1, 1), out_ref.shape)


def _pick_block_b(B, C, itemsize, max_tile_bytes=2 << 20):
    """Batch tile: <= ~2 MiB of logits per buffer, and >= 2 tiles when B >= 16."""
    rows = max(1, max_tile_bytes // max(1, C * itemsize))
    # v7x megacore: a 'parallel' grid axis only shards across the 2 TensorCores
    # if there are >= 2 grid steps.
    rows = min(rows, pl.cdiv(B, 2))
    rows = (rows // 8) * 8             # sublane granule (f32/int32); bf16-pack ok
    if rows < 8:
        return B                        # tiny batch: single full-array tile
    return min(rows, B)


def _vmem_limit_bytes(block_b, C, itemsize):
    """Explicit scoped-VMEM budget: 2x input buffers + f32 temps + headroom."""
    in_buf = block_b * C * itemsize + block_b * 4        # logits + targets tile
    f32_tmp = block_b * C * 4                            # (TB, C) f32 temporaries
    est = 2 * in_buf + 4 * f32_tmp + 2 * (8 * 128 * 4) + (2 << 20)
    return int(min(48 << 20, max(16 << 20, est)))


def focal_loss(logits, targets, *, gamma=2, alpha=1.0, block_b=None):
    """Focal loss over (B, C) logits and (B,) integer targets. Returns scalar f32."""
    B, C = logits.shape
    targets2d = targets.reshape(B, 1).astype(jnp.int32)
    itemsize = jnp.dtype(logits.dtype).itemsize

    if block_b is None:
        block_b = _pick_block_b(B, C, itemsize)
    num_tiles = pl.cdiv(B, block_b)

    kernel = functools.partial(
        _focal_loss_kernel, gamma=gamma, alpha=float(alpha), batch=B, block_b=block_b
    )

    cost = pl.CostEstimate(
        flops=8 * B * C + 16 * B,
        transcendentals=B * C + 3 * B,
        bytes_accessed=B * C * itemsize + B * 4 + num_tiles * 8 * 128 * 4,
    )

    partial_sums = pl.pallas_call(
        kernel,
        out_shape=jax.ShapeDtypeStruct((num_tiles, 8, 128), jnp.float32),
        grid_spec=pltpu.PrefetchScalarGridSpec(
            num_scalar_prefetch=0,
            grid=(num_tiles,),
            in_specs=[
                pl.BlockSpec((block_b, C), lambda i: (i, 0)),
                pl.BlockSpec((block_b, 1), lambda i: (i, 0)),
            ],
            out_specs=pl.BlockSpec((1, 8, 128), lambda i: (i, 0, 0)),
        ),
        compiler_params=pltpu.CompilerParams(
            # No carried state across tiles -> fully parallel (megacore on v7x).
            dimension_semantics=("parallel",),
            vmem_limit_bytes=_vmem_limit_bytes(block_b, C, itemsize),
        ),
        cost_estimate=cost,
    )(logits, targets2d)

    # One tiny reduction + a single divide-by-B.
    return jnp.sum(partial_sums[:, 0, 0]) / jnp.float32(B)


def _focal_loss_ref(logits, targets, gamma=2, alpha=1.0):
    """Pure-JAX reference for correctness checking."""
    logits = logits.astype(jnp.float32)
    lse = jax.nn.logsumexp(logits, axis=-1)
    tgt_logit = jnp.take_along_axis(logits, targets[:, None], axis=-1)[:, 0]
    ce = lse - tgt_logit
    pt = jnp.exp(-ce)
    return jnp.mean(alpha * (1.0 - pt) ** gamma * ce)


if __name__ == "__main__":
    key = jax.random.PRNGKey(0)
    k_logits, k_targets = jax.random.split(key)

    # Small shapes implied by the module: (batch, num_classes) logits + int targets.
    B, C = 16, 8
    logits = jax.random.normal(k_logits, (B, C), dtype=jnp.float32)
    targets = jax.random.randint(k_targets, (B,), 0, C, dtype=jnp.int32)

    # f32 logits, integer gamma (default PyTorch config); 2-tile parallel grid.
    loss = jax.block_until_ready(focal_loss(logits, targets, gamma=2, alpha=1.0))
    ref = _focal_loss_ref(logits, targets, gamma=2, alpha=1.0)
    assert jnp.allclose(loss, ref, rtol=1e-5, atol=1e-6), (loss, ref)

    # bf16 logits: no wrapper upcast, f32 math inside the kernel.
    logits_bf16 = logits.astype(jnp.bfloat16)
    loss_bf = jax.block_until_ready(focal_loss(logits_bf16, targets, gamma=2, alpha=1.0))
    ref_bf = _focal_loss_ref(logits_bf16, targets, gamma=2, alpha=1.0)
    assert jnp.allclose(loss_bf, ref_bf, rtol=1e-2, atol=1e-3), (loss_bf, ref_bf)

    # Non-integer gamma exercises the pow fallback + clamp path.
    loss_g = jax.block_until_ready(focal_loss(logits, targets, gamma=1.5, alpha=0.25))
    ref_g = _focal_loss_ref(logits, targets, gamma=1.5, alpha=0.25)
    assert jnp.allclose(loss_g, ref_g, rtol=1e-5, atol=1e-6), (loss_g, ref_g)

    # Ragged batch (B=20 -> 3 tiles, last one partial) with a lane-dense class dim.
    B2, C2 = 20, 128
    k2a, k2b = jax.random.split(jax.random.PRNGKey(1))
    logits2 = jax.random.normal(k2a, (B2, C2), dtype=jnp.float32)
    targets2 = jax.random.randint(k2b, (B2,), 0, C2, dtype=jnp.int32)
    loss2 = jax.block_until_ready(focal_loss(logits2, targets2, gamma=2, alpha=1.0))
    ref2 = _focal_loss_ref(logits2, targets2, gamma=2, alpha=1.0)
    assert jnp.allclose(loss2, ref2, rtol=1e-5, atol=1e-6), (loss2, ref2)

    print("KERNEL_OK")
</pallas_src>

<mosaic_0001>
module attributes {stable_mosaic.version = 11 : i64} {
  func.func @_focal_loss_kernel(%arg0: i32, %arg1: memref<8x8xf32, #tpu.memory_space<vmem>>, %arg2: memref<8x1xi32, #tpu.memory_space<vmem>>, %arg3: memref<1x8x128xf32, #tpu.memory_space<vmem>>) attributes {dimension_semantics = [#tpu.dimension_semantics<parallel>], iteration_bounds = array<i64: 2>, scalar_prefetch = 0 : i64, scratch_operands = 0 : i64, tpu.core_type = #tpu.core_type<tc>, window_params = [{transform_indices = @transform_0, window_bounds = array<i64: 8, 8>}, {transform_indices = @transform_1, window_bounds = array<i64: 8, 1>}, {transform_indices = @transform_2, window_bounds = array<i64: 1, 8, 128>}]} {
    %c0 = arith.constant 0 : index
    %c0_0 = arith.constant 0 : index
    %0 = vector.load %arg1[%c0, %c0_0] : memref<8x8xf32, #tpu.memory_space<vmem>>, vector<8x8xf32>
    %cst = arith.constant dense<0xFF800000> : vector<8xf32>
    %1 = vector.multi_reduction <maximumf>, %0, %cst [1] : vector<8x8xf32> to vector<8xf32>
    %2 = vector.shape_cast %1 : vector<8xf32> to vector<8x1xf32>
    %3 = vector.broadcast %2 : vector<8x1xf32> to vector<8x8xf32>
    %4 = arith.subf %0, %3 : vector<8x8xf32>
    %5 = math.exp %4 : vector<8x8xf32>
    %cst_1 = arith.constant dense<0.000000e+00> : vector<8xf32>
    %6 = vector.multi_reduction <add>, %5, %cst_1 [1] : vector<8x8xf32> to vector<8xf32>
    %7 = vector.shape_cast %6 : vector<8xf32> to vector<8x1xf32>
    %c0_2 = arith.constant 0 : index
    %c0_3 = arith.constant 0 : index
    %8 = vector.load %arg2[%c0_2, %c0_3] : memref<8x1xi32, #tpu.memory_space<vmem>>, vector<8x1xi32>
    %9 = tpu.iota {dimensions = array<i32: 1>} : vector<1x8xi32>
    %10 = vector.broadcast %9 : vector<1x8xi32> to vector<8x8xi32>
    %11 = vector.broadcast %8 : vector<8x1xi32> to vector<8x8xi32>
    %12 = arith.cmpi eq, %10, %11 : vector<8x8xi32>
    %cst_4 = arith.constant 0.000000e+00 : f32
    %13 = vector.broadcast %cst_4 : f32 to vector<8x8xf32>
    %14 = arith.select %12, %4, %13 : vector<8x8xi1>, vector<8x8xf32>
    %cst_5 = arith.constant dense<0.000000e+00> : vector<8xf32>
    %15 = vector.multi_reduction <add>, %14, %cst_5 [1] : vector<8x8xf32> to vector<8xf32>
    %16 = vector.shape_cast %15 : vector<8xf32> to vector<8x1xf32>
    %17 = math.log %7 : vector<8x1xf32>
    %18 = arith.subf %17, %16 : vector<8x1xf32>
    %cst_6 = arith.constant 0.000000e+00 : f32
    %19 = vector.broadcast %cst_6 : f32 to vector<8x1xf32>
    %20 = arith.subf %19, %18 : vector<8x1xf32>
    %21 = math.exp %20 : vector<8x1xf32>
    %cst_7 = arith.constant 1.000000e+00 : f32
    %22 = vector.broadcast %cst_7 : f32 to vector<8x1xf32>
    %23 = arith.subf %22, %21 : vector<8x1xf32>
    %cst_8 = arith.constant 0.000000e+00 : f32
    %24 = vector.broadcast %cst_8 : f32 to vector<8x1xf32>
    %25 = arith.maximumf %23, %24 : vector<8x1xf32>
    %26 = arith.mulf %25, %25 : vector<8x1xf32>
    %cst_9 = arith.constant 1.000000e+00 : f32
    %27 = vector.broadcast %cst_9 : f32 to vector<8x1xf32>
    %28 = arith.mulf %27, %26 : vector<8x1xf32>
    %29 = arith.mulf %28, %18 : vector<8x1xf32>
    %30 = tpu.iota {dimensions = array<i32: 0>} : vector<8x1xi32>
    %c8_i32 = arith.constant 8 : i32
    %31 = arith.muli %arg0, %c8_i32 : i32
    %32 = vector.broadcast %31 : i32 to vector<8x1xi32>
    %33 = arith.addi %32, %30 : vector<8x1xi32>
    %c16_i32 = arith.constant 16 : i32
    %34 = vector.broadcast %c16_i32 : i32 to vector<8x1xi32>
    %35 = arith.cmpi slt, %33, %34 : vector<8x1xi32>
    %cst_10 = arith.constant 0.000000e+00 : f32
    %36 = vector.broadcast %cst_10 : f32 to vector<8x1xf32>
    %37 = arith.select %35, %29, %36 : vector<8x1xi1>, vector<8x1xf32>
    %38 = vector.shape_cast %37 : vector<8x1xf32> to vector<1x8x1xf32>
    %cst_11 = arith.constant dense<0.000000e+00> : vector<1xf32>
    %39 = vector.multi_reduction <add>, %38, %cst_11 [1, 2] : vector<1x8x1xf32> to vector<1xf32>
    %40 = vector.shape_cast %39 : vector<1xf32> to vector<1x1x1xf32>
    %41 = vector.extract %40[0, 0, 0] : f32 from vector<1x1x1xf32>
    %42 = vector.broadcast %41 : f32 to vector<1x1xf32>
    %43 = vector.shape_cast %42 : vector<1x1xf32> to vector<1x1x1xf32>
    %44 = vector.shape_cast %43 : vector<1x1x1xf32> to vector<1x1x1xf32>
    %45 = vector.broadcast %44 : vector<1x1x1xf32> to vector<1x8x128xf32>
    %c0_12 = arith.constant 0 : index
    %c0_13 = arith.constant 0 : index
    %c0_14 = arith.constant 0 : index
    %46 = vector.load %arg3[%c0_12, %c0_13, %c0_14] : memref<1x8x128xf32, #tpu.memory_space<vmem>>, vector<1x8x128xf32>
    tpu.vector_store %arg3[%c0_12, %c0_13, %c0_14], %45 {strides = array<i32>} : memref<1x8x128xf32, #tpu.memory_space<vmem>>, vector<1x8x128xf32>,
    return
  }
  func.func @transform_0(%arg0: i32) -> (i32, i32) {
    %c0_i32 = arith.constant 0 : i32
    %c0_i32_0 = arith.constant 0 : i32
    return %arg0, %c0_i32 : i32, i32
  }
  func.func @transform_1(%arg0: i32) -> (i32, i32) {
    %c0_i32 = arith.constant 0 : i32
    %c0_i32_0 = arith.constant 0 : i32
    return %arg0, %c0_i32 : i32, i32
  }
  func.func @transform_2(%arg0: i32) -> (i32, i32, i32) {
    %c0_i32 = arith.constant 0 : i32
    %c0_i32_0 = arith.constant 0 : i32
    %c0_i32_1 = arith.constant 0 : i32
    return %arg0, %c0_i32, %c0_i32_0 : i32, i32, i32
  }
}

</mosaic_0001>

<llo_original>
// kernel: tpu_custom_call.1
$region0: #{tpu_custom_call.1}
  #allocation0 [shape = 'u32[]', space=smem, size = 0x4, offset = 0x4, fixed_abs, tag = 'smem constant byte address 0x4 - core index']
  #allocation1 [shape = 'u32[72,128]{1,0:T(1,128)}', space=vmem, size = 0x9000, scoped, tag = 'internal scratch']
  %s0 = inlined_call_operand.vmem [shape: f32[16,8], index: 0, kind: input, shape index: {}]
  %s1 = inlined_call_operand.vmem [shape: s32[16,1], index: 1, kind: input, shape index: {}]
  %s2 = inlined_call_operand.hbm [shape: f32[2,8,128], index: 2, kind: output, shape index: {}]
  %s3 = sld [smem:[#allocation0]]
  $region41: #{tpu_custom_call.1} parent=0
    _
  %s5 = ssub.s32 1, %s3
  %s6 = scalar_select 0, %s5, %s3
  $region1: #{tpu_custom_call.1} parent=0
    #allocation2 [shape = 'u8[8192]{0}', space=vmem, size = 0x2000, scoped, tag = 'output window, operand 0']
    #allocation3 [shape = 's32[2]{0}', space=sflag, size = 0x8, scoped, tag = 'scoped memory for tpu_custom_call.1']
    %7 = vsyncpa [#allocation3], 0
    %s8 = scalar_lea.sflag [#allocation3], 1
    %9 = vsyncpa %s8, 0
    loop: start=0, step=1, limit=4
    $region2: #{tpu_custom_call.1} parent=1 // loop_pre_header
      _
    $region3: #{tpu_custom_call.1} parent=1 // loop_header
      %s11 = sphi 0, %s15
      %p12 = scmp.ge.s32.totalorder %s11, 4
      %s21 = sphi 0, %s23
      %s24 = sphi 0, %s21
      %s25 = sphi 0, %s24
      %s41 = sphi 0, %s25
      %s47 = sphi 0, %s49
      %s50 = sphi 0, %s47
      %s51 = sphi 0, %s50
      %s67 = sphi 0, %s51
      %s73 = sphi 0, %s75
      %s76 = sphi 0, %s73
      %s77 = sphi 0, %s76
      %s93 = sphi 0, %s77
    $region4: #{tpu_custom_call.1} parent=1 // loop_header_branch
      %14 = sbr.rel (%p12) target = $region8
    $region5: #{tpu_custom_call.1} parent=1 // loop_body
      %s16 = ssub.s32 %s11, 1
      %s17 = ssub.s32 %s11, 2
      %s18 = sadd.s32 %s11, 1
      %s19 = ssub.s32 %s11, %s18
      %p20 = scmp.eq.s32.totalorder %s19, 0
      %s22 = sadd.s32 %s21, 1
      %s23 = scalar_select %p20, %s21, %s22
      %p26 = pneg %p20
      %p27 = scmp.eq.s32.totalorder %s11, 1
      %p28 = por %p26, %p27
      %p29 = scmp.ne.s32.totalorder %s21, %s24
      %p30 = scmp.eq.s32.totalorder %s11, 0
      %p31 = por %p29, %p30
      %p32 = scmp.ne.s32.totalorder %s21, %s24
      %p33 = scmp.eq.s32.totalorder %s16, 1
      %p34 = por %p32, %p33
      %p35 = scmp.ne.s32.totalorder %s24, %s25
      %p36 = scmp.eq.s32.totalorder %s16, 0
      %p37 = por %p35, %p36
      %p38 = scmp.ne.s32.totalorder %s24, %s25
      %p39 = scmp.eq.s32.totalorder %s17, 1
      %p40 = por %p38, %p39
      %p42 = scmp.ne.s32.totalorder %s25, %s41
      %p43 = scmp.eq.s32.totalorder %s17, 0
      %p44 = por %p42, %p43
      %s45 = ssub.s32 %s11, %s18
      %p46 = scmp.eq.s32.totalorder %s45, 0
      %s48 = sadd.s32 %s47, 1
      %s49 = scalar_select %p46, %s47, %s48
      %p52 = pneg %p46
      %p53 = scmp.eq.s32.totalorder %s11, 1
      %p54 = por %p52, %p53
      %p55 = scmp.ne.s32.totalorder %s47, %s50
      %p56 = scmp.eq.s32.totalorder %s11, 0
      %p57 = por %p55, %p56
      %p58 = scmp.ne.s32.totalorder %s47, %s50
      %p59 = scmp.eq.s32.totalorder %s16, 1
      %p60 = por %p58, %p59
      %p61 = scmp.ne.s32.totalorder %s50, %s51
      %p62 = scmp.eq.s32.totalorder %s16, 0
      %p63 = por %p61, %p62
      %p64 = scmp.ne.s32.totalorder %s50, %s51
      %p65 = scmp.eq.s32.totalorder %s17, 1
      %p66 = por %p64, %p65
      %p68 = scmp.ne.s32.totalorder %s51, %s67
      %p69 = scmp.eq.s32.totalorder %s17, 0
      %p70 = por %p68, %p69
      %s71 = ssub.s32 %s11, %s18
      %p72 = scmp.eq.s32.totalorder %s71, 0
      %s74 = sadd.s32 %s73, 1
      %s75 = scalar_select %p72, %s73, %s74
      %p78 = pneg %p72
      %p79 = scmp.eq.s32.totalorder %s11, 1
      %p80 = por %p78, %p79
      %p81 = scmp.ne.s32.totalorder %s73, %s76
      %p82 = scmp.eq.s32.totalorder %s11, 0
      %p83 = por %p81, %p82
      %p84 = scmp.ne.s32.totalorder %s73, %s76
      %p85 = scmp.eq.s32.totalorder %s16, 1
      %p86 = por %p84, %p85
      %p87 = scmp.ne.s32.totalorder %s76, %s77
      %p88 = scmp.eq.s32.totalorder %s16, 0
      %p89 = por %p87, %p88
      %p90 = scmp.ne.s32.totalorder %s76, %s77
      %p91 = scmp.eq.s32.totalorder %s17, 1
      %p92 = por %p90, %p91
      %p94 = scmp.ne.s32.totalorder %s77, %s93
      %p95 = scmp.eq.s32.totalorder %s17, 0
      %p96 = por %p94, %p95
      %p97 = scmp.le.s32.totalorder 1, %s11
      %p98 = scmp.lt.s32.totalorder %s11, 3
      %p99 = pnand %p97, %p98
      %p100 = pneg %p99
      // Predicated region
      $region9: #{tpu_custom_call.1} parent=5 // pred_check
        _
      $region10: #{tpu_custom_call.1} parent=5 // pred_check_branch
        %102 = sbr.rel (%p99) target = $region12
      $region11: #{tpu_custom_call.1} parent=5 // pred_region
        %s103 = ssub.s32 %s11, 1
      $region12: #{tpu_custom_call.1} parent=5 // pred_fallthru
        _
      %p104 = scmp.lt.s32.totalorder %s11, 2
      // Predicated region
      $region13: #{tpu_custom_call.1} parent=5 // pred_check
        %p105 = pneg %p104
      $region14: #{tpu_custom_call.1} parent=5 // pred_check_branch
        %107 = sbr.rel (%p105) target = $region16
      $region15: #{tpu_custom_call.1} parent=5 // pred_region
        // Predicated region
        $region17: #{tpu_custom_call.1} parent=15 // pred_check
          %p108 = pneg %p31
        $region18: #{tpu_custom_call.1} parent=15 // pred_check_branch
          %110 = sbr.rel (%p108) target = $region20
        $region19: #{tpu_custom_call.1} parent=15 // pred_region
          %p111 = scmp.lt.s32.totalorder %s11, 1
          %s112 = scalar_select %p111, %s11, 1
          %s113 = smul.addr %s112, 8
          %s114 = scalar_lea.vmem %s0, %s113
        $region20: #{tpu_custom_call.1} parent=15 // pred_fallthru
          _
        // Predicated region
        $region21: #{tpu_custom_call.1} parent=15 // pred_check
          %p115 = pneg %p57
        $region22: #{tpu_custom_call.1} parent=15 // pred_check_branch
          %117 = sbr.rel (%p115) target = $region24
        $region23: #{tpu_custom_call.1} parent=15 // pred_region
          %p118 = scmp.lt.s32.totalorder %s11, 1
          %s119 = scalar_select %p118, %s11, 1
          %s120 = smul.addr %s119, 8
          %s121 = scalar_lea.vmem %s1, %s120
        $region24: #{tpu_custom_call.1} parent=15 // pred_fallthru
          _
      $region16: #{tpu_custom_call.1} parent=5 // pred_fallthru
        _
      %p122 = scmp.le.s32.totalorder 1, %s11
      %p123 = scmp.lt.s32.totalorder %s11, 3
      %p124 = pnand %p122, %p123
      %p125 = pneg %p124
      // Predicated region
      $region25: #{tpu_custom_call.1} parent=5 // pred_check
        _
      $region26: #{tpu_custom_call.1} parent=5 // pred_check_branch
        %127 = sbr.rel (%p124) target = $region28
      $region27: #{tpu_custom_call.1} parent=5 // pred_region
        %s128 = ssub.s32 %s11, 1
        %p129 = scmp.lt.s32.totalorder %s16, 1
        %s130 = scalar_select %p129, %s16, 1
        %s131 = smul.addr %s130, 8
        %s132 = scalar_lea.vmem %s0, %s131
        %p133 = pneg %p37
        %p134 = pneg %p34
        %p135 = scmp.lt.s32.totalorder %s16, 1
        %s136 = scalar_select %p135, %s16, 1
        %s137 = smul.addr %s136, 8
        %s138 = scalar_lea.vmem %s1, %s137
        %p139 = pneg %p63
        %p140 = pneg %p60
        %p141 = pneg %p89
        %p142 = pneg %p86
        %s143 = sand.u32 %s76, 1
        %s144 = scalar_lea.sflag [#allocation3], %s143
        %s145 = sand.u32 %s76, 1
        %s146 = smul.addr %s145, 8
        %s147 = scalar_lea.vmem [#allocation2], %s146
        %p148 = scmp.lt.s32.totalorder %s16, 1
        %s149 = scalar_select %p148, %s16, 1
        %s150 = smul.addr %s149, 8
        %s151 = scalar_lea.vmem %s0, %s150
        %p152 = scmp.lt.s32.totalorder %s16, 1
        %s153 = scalar_select %p152, %s16, 1
        %s154 = smul.addr %s153, 8
        %s155 = scalar_lea.vmem %s1, %s154
        %v156 = vld [vmem:[%s151] sm:$0xff]
        %vm157 = vcmask 64512
        %v158 = vsel %vm157, %v156, -inf
        %159 = vmax.xlane.f32.xlu0 %v158
        %v160 = vpop.xlane.xlu0 %159
        %v161 = vsub.f32 %v156, %v160
        %v162 = vmul.f32 %v161, 1.442695
        %v163 = vpow.pop %v162
        %v164 = vsel %vm157, %v163, 0.0
        %165 = vadd.xlane.f32.xlu0 %v164
        %v166 = vpop.xlane.xlu0 %165
        %v167 = vld [vmem:[%s155] sm:$0xff]
        %v168 = vlaneseq
        %v169 = vand.u32 %v168, 127
        %170 = vset.pattern.permute.xlu0 0
        %171 = vperm.xlu0 %170, %v167
        %v172 = vpop.permute.xlu0 %171
        %vm173 = vcmp.eq.s32.totalorder %v169, %v172
        %v174 = vsel %vm173, %v161, 0.0
        %v175 = vsel %vm157, %v174, 0.0
        %176 = vadd.xlane.f32.xlu0 %v175
        %v177 = vpop.xlane.xlu0 %176
        %v178 = vlog2.pop %v166
        %v179 = vmul.f32 %v178, 0.6931472
        %v180 = vsub.f32 %v179, %v177
        %v181 = vsub.f32 0.0, %v180
        %v182 = vmul.f32 %v181, 1.442695
        %v183 = vpow.pop %v182
        %v184 = vsub.f32 1.0, %v183
        %v185 = vmax.f32 %v184, 0.0
        %v186 = vmul.f32 %v185, %v185
        %v187 = vmul.f32 %v186, %v180
        %v188 = vlaneseq
        %v189 = vshrl.u32 %v188, 7
        %s190 = smul.u32 %s16, 8
        %v191 = vstv %s190
        %v192 = vadd.s32 %v191, %v189
        %vm193 = vcmp.lt.s32.totalorder %v192, 16
        %v194 = vsel %vm193, %v187, 0.0
        %vm195 = vcmask 7168
        %v196 = vsel %vm195, %v194, 0.0
        %197 = vadd.xlane.f32.xlu0 %v196
        %v198 = vpop.xlane.xlu0 %197
        %v199 = vrot.slane %v198, 4
        %v200 = vadd.f32 %v198, %v199
        %v201 = vrot.slane %v200, 2
        %v202 = vadd.f32 %v200, %v201
        %v203 = vrot.slane %v202, 1
        %v204 = vadd.f32 %v202, %v203
        %s205 = vtos %v204
        %v206 = vstv %s205
        %207 = vst [vmem:[%s147] sm:$0xff] %v206
        %s208 = sand.u32 %s76, 1
        %s209 = scalar_lea.sflag [#allocation3], %s208
        %s210 = sand.u32 %s76, 1
        %s211 = smul.addr %s210, 8
        %s212 = scalar_lea.vmem [#allocation2], %s211
        // Predicated region
        $region29: #{tpu_custom_call.1} parent=27 // pred_check
          %p213 = pneg %p86
        $region30: #{tpu_custom_call.1} parent=27 // pred_check_branch
          %215 = sbr.rel (%p213) target = $region32
        $region31: #{tpu_custom_call.1} parent=27 // pred_region
          %217 = vsyncadd %s209, 0
          %s218 = smul.addr %s16, 8
          %s219 = scalar_lea.hbm %s2, %s218
          %s221 = sshll.u32 %s212, 4
          %s222 = int_to_ptr.vmem [resolvable:$true] %s221
          %s223 = sshll.u32 %s219, 4
          %s224 = int_to_ptr.hbm [resolvable:$true] %s223
          %226 = dma.vmem_to_hbm [thread:$0]  %s222, 128, %s224, %s209
        $region32: #{tpu_custom_call.1} parent=27 // pred_fallthru
          _
      $region28: #{tpu_custom_call.1} parent=5 // pred_fallthru
        _
      %p227 = scmp.le.s32.totalorder 2, %s11
      // Predicated region
      $region33: #{tpu_custom_call.1} parent=5 // pred_check
        %p228 = pneg %p227
      $region34: #{tpu_custom_call.1} parent=5 // pred_check_branch
        %230 = sbr.rel (%p228) target = $region36
      $region35: #{tpu_custom_call.1} parent=5 // pred_region
        %s231 = ssub.s32 %s11, 2
        // Predicated region
        $region37: #{tpu_custom_call.1} parent=35 // pred_check
          %p232 = pneg %p92
        $region38: #{tpu_custom_call.1} parent=35 // pred_check_branch
          %234 = sbr.rel (%p232) target = $region40
        $region39: #{tpu_custom_call.1} parent=35 // pred_region
          %s235 = sand.u32 %s77, 1
          %s236 = scalar_lea.sflag [#allocation3], %s235
          %s237 = sand.u32 %s77, 1
          %s238 = smul.addr %s237, 8
          %s239 = scalar_lea.vmem [#allocation2], %s238
          %241 = dma.done %s236, 128
        $region40: #{tpu_custom_call.1} parent=35 // pred_fallthru
          _
      $region36: #{tpu_custom_call.1} parent=5 // pred_fallthru
        _
    $region6: #{tpu_custom_call.1} parent=1 // loop_footer
      %s15 = sadd.s32 1, %s11
    $region7: #{tpu_custom_call.1} parent=1 // loop_footer_branch
      %10 = sbr.rel target = $region3
    $region8: #{tpu_custom_call.1} parent=1 // loop_exit
      _
    %242 = vsyncpa [#allocation3], 1
    %s243 = scalar_lea.sflag [#allocation3], 1
    %244 = vsyncpa %s243, 1

</llo_original>
